<compile_context>
chip_gen: v7x
topology: tpu7x:2x2x1
jax: 0.10.0
libtpu: 0.0.40
codegen_flags: <defaults>
</compile_context>

<pallas_src>
import jax
import jax.numpy as jnp
from jax.experimental import pallas as pl
from jax.experimental.pallas import tpu as pltpu


def policy_kernel(x_ref, w1_ref, b1_ref, w2_ref, b2_ref, out_ref):
    # Transposed, lane-dense layout: batch lives on the 128-lane axis.
    #   x_ref:  (4, TB)     w1_ref: (128, 4)    b1_ref: (128, 1)
    #   w2_ref: (128, 2)    b2_ref: (1, 2)      out_ref: (2, TB)
    x = x_ref[...]

    # Layer 1 on the VPU: 4 broadcast multiply-adds of (128,1) x (1,TB).
    # (A K=4 MXU matmul would be >97% zero-padding + MXU push/pop latency.)
    h = (w1_ref[:, 0:1] * x[0:1, :]
         + w1_ref[:, 1:2] * x[1:2, :]
         + w1_ref[:, 2:3] * x[2:3, :]
         + w1_ref[:, 3:4] * x[3:4, :]
         + b1_ref[...])                                   # (128, TB) f32

    # Dropout(p=0.5): eval-mode identity.
    # TODO(synk): training-mode stochastic dropout (pltpu.prng_*) not implemented.
    h = jnp.maximum(h, 0.0)                               # ReLU

    # Layer 2 on the VPU: each of the 2 logit rows is a multiply + sublane sum.
    # (An MXU matmul with N=2 would use 2 of 256 output columns.)
    s0 = jnp.sum(h * w2_ref[:, 0:1], axis=0, keepdims=True) + b2_ref[:, 0:1]  # (1, TB)
    s1 = jnp.sum(h * w2_ref[:, 1:2], axis=0, keepdims=True) + b2_ref[:, 1:2]  # (1, TB)

    # Specialized 2-class softmax: p0 = 1 / (1 + exp(s1 - s0)), p1 = 1 - p0.
    # One EUP exp + one approx EUP reciprocal (free slots) instead of
    # max / 2x exp / sum / divide.
    p0 = pl.reciprocal(1.0 + jnp.exp(s1 - s0), approx=True)
    p1 = 1.0 - p0
    out_ref[...] = jnp.concatenate([p0, p1], axis=0).astype(out_ref.dtype)


def policy_forward(x, w1, b1, w2, b2, *, tb=512):
    """Forward pass of Policy in eval mode.

    x:  (B, 4) float32 observations (torch nn.Linear convention).
    w1: (128, 4)  (out_features, in_features) == torch l1.weight
    b1: (128, 1)  == torch l1.bias[:, None]
    w2: (128, 2)  == torch l2.weight.T
    b2: (1, 2)    == torch l2.bias[None, :]
    Returns (B, 2) action probabilities (softmax over dim=1).
    """
    B = x.shape[0]

    # Lane-dense batch tiling: tile size is a multiple of 128, batch padded up.
    tb = max(128, (int(tb) // 128) * 128)
    bp_min = ((B + 127) // 128) * 128
    tb = min(tb, bp_min)
    n_tiles = -(-B // tb)
    Bp = n_tiles * tb

    # (B, 4) -> lane-dense (4, Bp), zero-padded past B (padded columns are
    # sliced off below; zeros keep everything finite through the softmax).
    xt = jnp.zeros((4, Bp), jnp.float32).at[:, :B].set(x.T.astype(jnp.float32))

    cost = pl.CostEstimate(
        flops=2 * Bp * (4 * 128 + 128 * 2),
        transcendentals=Bp,
        bytes_accessed=(4 * Bp + 2 * Bp + 128 * 4 + 128 + 128 * 2 + 2) * 4,
    )

    out_t = pl.pallas_call(
        policy_kernel,
        out_shape=jax.ShapeDtypeStruct((2, Bp), jnp.float32),
        grid=(n_tiles,),
        in_specs=[
            pl.BlockSpec((4, tb), lambda i: (0, i)),      # x tile (batch on lanes)
            pl.BlockSpec((128, 4), lambda i: (0, 0)),     # w1 (VMEM-resident)
            pl.BlockSpec((128, 1), lambda i: (0, 0)),     # b1
            pl.BlockSpec((128, 2), lambda i: (0, 0)),     # w2
            pl.BlockSpec((1, 2), lambda i: (0, 0)),       # b2
        ],
        out_specs=pl.BlockSpec((2, tb), lambda i: (0, i)),
        compiler_params=pltpu.CompilerParams(
            dimension_semantics=("parallel",),            # v7x: shard tiles over both TCs
        ),
        cost_estimate=cost,
    )(xt, w1, b1, w2, b2)

    return out_t[:, :B].T                                 # back to (B, 2)


def init_params(key):
    # Deterministic init mimicking torch.nn.Linear defaults:
    # U(-1/sqrt(fan_in), 1/sqrt(fan_in)) for both weights and biases.
    k1, k2, k3, k4 = jax.random.split(key, 4)
    bound1 = 1.0 / jnp.sqrt(4.0)
    w1 = jax.random.uniform(k1, (128, 4), jnp.float32, -bound1, bound1)   # (out, in)
    b1 = jax.random.uniform(k2, (128, 1), jnp.float32, -bound1, bound1)
    bound2 = 1.0 / jnp.sqrt(128.0)
    w2 = jax.random.uniform(k3, (128, 2), jnp.float32, -bound2, bound2)   # (in, out)
    b2 = jax.random.uniform(k4, (1, 2), jnp.float32, -bound2, bound2)
    return w1, b1, w2, b2


def reference_forward(x, w1, b1, w2, b2):
    h = jnp.maximum(x @ w1.T + b1[:, 0], 0.0)   # (B, 128)
    s = h @ w2 + b2                             # (B, 2)
    return jax.nn.softmax(s, axis=1)


if __name__ == "__main__":
    key = jax.random.PRNGKey(0)
    k_params, k_x1, k_x2 = jax.random.split(key, 3)
    w1, b1, w2, b2 = init_params(k_params)

    # CartPole observation: 4 features per state; small batch of 8 states.
    x = jax.random.normal(k_x1, (8, 4), jnp.float32)
    out = jax.block_until_ready(policy_forward(x, w1, b1, w2, b2))
    ref = reference_forward(x, w1, b1, w2, b2)
    assert out.shape == (8, 2)
    assert jnp.allclose(out, ref, atol=2e-3, rtol=2e-3)
    assert jnp.allclose(jnp.sum(out, axis=1), 1.0, atol=1e-5)

    # Rollout-sized batch that is not a multiple of the lane tile: exercises
    # padding + multi-tile grid + the "parallel" batch axis.
    x2 = jax.random.normal(k_x2, (300, 4), jnp.float32)
    out2 = jax.block_until_ready(policy_forward(x2, w1, b1, w2, b2, tb=128))
    ref2 = reference_forward(x2, w1, b1, w2, b2)
    assert out2.shape == (300, 2)
    assert jnp.allclose(out2, ref2, atol=2e-3, rtol=2e-3)
    assert jnp.allclose(jnp.sum(out2, axis=1), 1.0, atol=1e-5)

    print("KERNEL_OK")
</pallas_src>

<mosaic_0001>
module attributes {stable_mosaic.version = 11 : i64} {
  func.func @policy_kernel(%arg0: i32, %arg1: memref<4x128xf32, #tpu.memory_space<vmem>>, %arg2: memref<128x4xf32, #tpu.memory_space<vmem>>, %arg3: memref<128x1xf32, #tpu.memory_space<vmem>>, %arg4: memref<128x2xf32, #tpu.memory_space<vmem>>, %arg5: memref<1x2xf32, #tpu.memory_space<vmem>>, %arg6: memref<2x128xf32, #tpu.memory_space<vmem>>) attributes {dimension_semantics = [#tpu.dimension_semantics<parallel>], iteration_bounds = array<i64: 1>, scalar_prefetch = 0 : i64, scratch_operands = 0 : i64, tpu.core_type = #tpu.core_type<tc>, window_params = [{transform_indices = @transform_0, window_bounds = array<i64: 4, 128>}, {pipeline_mode = #tpu.pipeline_mode<synchronous>, transform_indices = @transform_1, window_bounds = array<i64: 128, 4>}, {pipeline_mode = #tpu.pipeline_mode<synchronous>, transform_indices = @transform_2, window_bounds = array<i64: 128, 1>}, {pipeline_mode = #tpu.pipeline_mode<synchronous>, transform_indices = @transform_3, window_bounds = array<i64: 128, 2>}, {pipeline_mode = #tpu.pipeline_mode<synchronous>, transform_indices = @transform_4, window_bounds = array<i64: 1, 2>}, {transform_indices = @transform_5, window_bounds = array<i64: 2, 128>}]} {
    %c0 = arith.constant 0 : index
    %c0_0 = arith.constant 0 : index
    %0 = vector.load %arg1[%c0, %c0_0] : memref<4x128xf32, #tpu.memory_space<vmem>>, vector<4x128xf32>
    %c0_1 = arith.constant 0 : index
    %c0_2 = arith.constant 0 : index
    %1 = vector.load %arg2[%c0_1, %c0_2] : memref<128x4xf32, #tpu.memory_space<vmem>>, vector<128x1xf32>
    %2 = vector.extract_strided_slice %0 {offsets = [0, 0], sizes = [1, 128], strides = [1, 1]} : vector<4x128xf32> to vector<1x128xf32>
    %3 = vector.broadcast %1 : vector<128x1xf32> to vector<128x128xf32>
    %4 = vector.broadcast %2 : vector<1x128xf32> to vector<128x128xf32>
    %5 = arith.mulf %3, %4 : vector<128x128xf32>
    %c0_3 = arith.constant 0 : index
    %c1 = arith.constant 1 : index
    %6 = vector.load %arg2[%c0_3, %c1] : memref<128x4xf32, #tpu.memory_space<vmem>>, vector<128x1xf32>
    %7 = vector.extract_strided_slice %0 {offsets = [1, 0], sizes = [1, 128], strides = [1, 1]} : vector<4x128xf32> to vector<1x128xf32>
    %8 = vector.broadcast %6 : vector<128x1xf32> to vector<128x128xf32>
    %9 = vector.broadcast %7 : vector<1x128xf32> to vector<128x128xf32>
    %10 = arith.mulf %8, %9 : vector<128x128xf32>
    %11 = arith.addf %5, %10 : vector<128x128xf32>
    %c0_4 = arith.constant 0 : index
    %c2 = arith.constant 2 : index
    %12 = vector.load %arg2[%c0_4, %c2] : memref<128x4xf32, #tpu.memory_space<vmem>>, vector<128x1xf32>
    %13 = vector.extract_strided_slice %0 {offsets = [2, 0], sizes = [1, 128], strides = [1, 1]} : vector<4x128xf32> to vector<1x128xf32>
    %14 = vector.broadcast %12 : vector<128x1xf32> to vector<128x128xf32>
    %15 = vector.broadcast %13 : vector<1x128xf32> to vector<128x128xf32>
    %16 = arith.mulf %14, %15 : vector<128x128xf32>
    %17 = arith.addf %11, %16 : vector<128x128xf32>
    %c0_5 = arith.constant 0 : index
    %c3 = arith.constant 3 : index
    %18 = vector.load %arg2[%c0_5, %c3] : memref<128x4xf32, #tpu.memory_space<vmem>>, vector<128x1xf32>
    %19 = vector.extract_strided_slice %0 {offsets = [3, 0], sizes = [1, 128], strides = [1, 1]} : vector<4x128xf32> to vector<1x128xf32>
    %20 = vector.broadcast %18 : vector<128x1xf32> to vector<128x128xf32>
    %21 = vector.broadcast %19 : vector<1x128xf32> to vector<128x128xf32>
    %22 = arith.mulf %20, %21 : vector<128x128xf32>
    %23 = arith.addf %17, %22 : vector<128x128xf32>
    %c0_6 = arith.constant 0 : index
    %c0_7 = arith.constant 0 : index
    %24 = vector.load %arg3[%c0_6, %c0_7] : memref<128x1xf32, #tpu.memory_space<vmem>>, vector<128x1xf32>
    %25 = vector.broadcast %24 : vector<128x1xf32> to vector<128x128xf32>
    %26 = arith.addf %23, %25 : vector<128x128xf32>
    %cst = arith.constant 0.000000e+00 : f32
    %27 = vector.broadcast %cst : f32 to vector<128x128xf32>
    %28 = arith.maximumf %26, %27 : vector<128x128xf32>
    %c0_8 = arith.constant 0 : index
    %c0_9 = arith.constant 0 : index
    %29 = vector.load %arg4[%c0_8, %c0_9] : memref<128x2xf32, #tpu.memory_space<vmem>>, vector<128x1xf32>
    %30 = vector.broadcast %29 : vector<128x1xf32> to vector<128x128xf32>
    %31 = arith.mulf %28, %30 : vector<128x128xf32>
    %cst_10 = arith.constant dense<0.000000e+00> : vector<128xf32>
    %32 = vector.multi_reduction <add>, %31, %cst_10 [0] : vector<128x128xf32> to vector<128xf32>
    %33 = vector.shape_cast %32 : vector<128xf32> to vector<1x128xf32>
    %c0_11 = arith.constant 0 : index
    %c0_12 = arith.constant 0 : index
    %34 = vector.load %arg5[%c0_11, %c0_12] : memref<1x2xf32, #tpu.memory_space<vmem>>, vector<1x1xf32>
    %35 = vector.broadcast %34 : vector<1x1xf32> to vector<1x128xf32>
    %36 = arith.addf %33, %35 : vector<1x128xf32>
    %c0_13 = arith.constant 0 : index
    %c1_14 = arith.constant 1 : index
    %37 = vector.load %arg4[%c0_13, %c1_14] : memref<128x2xf32, #tpu.memory_space<vmem>>, vector<128x1xf32>
    %38 = vector.broadcast %37 : vector<128x1xf32> to vector<128x128xf32>
    %39 = arith.mulf %28, %38 : vector<128x128xf32>
    %cst_15 = arith.constant dense<0.000000e+00> : vector<128xf32>
    %40 = vector.multi_reduction <add>, %39, %cst_15 [0] : vector<128x128xf32> to vector<128xf32>
    %41 = vector.shape_cast %40 : vector<128xf32> to vector<1x128xf32>
    %c0_16 = arith.constant 0 : index
    %c1_17 = arith.constant 1 : index
    %42 = vector.load %arg5[%c0_16, %c1_17] : memref<1x2xf32, #tpu.memory_space<vmem>>, vector<1x1xf32>
    %43 = vector.broadcast %42 : vector<1x1xf32> to vector<1x128xf32>
    %44 = arith.addf %41, %43 : vector<1x128xf32>
    %45 = arith.subf %44, %36 : vector<1x128xf32>
    %46 = math.exp %45 : vector<1x128xf32>
    %cst_18 = arith.constant 1.000000e+00 : f32
    %47 = vector.broadcast %cst_18 : f32 to vector<1x128xf32>
    %48 = arith.addf %47, %46 : vector<1x128xf32>
    %49 = tpu.reciprocal %48 {approx = true} : vector<1x128xf32> -> vector<1x128xf32>
    %cst_19 = arith.constant 1.000000e+00 : f32
    %50 = vector.broadcast %cst_19 : f32 to vector<1x128xf32>
    %51 = arith.subf %50, %49 : vector<1x128xf32>
    %52 = tpu.concatenate %49, %51 in 0 : vector<1x128xf32>, vector<1x128xf32> -> vector<2x128xf32>
    %c0_20 = arith.constant 0 : index
    %c0_21 = arith.constant 0 : index
    %53 = vector.load %arg6[%c0_20, %c0_21] : memref<2x128xf32, #tpu.memory_space<vmem>>, vector<2x128xf32>
    tpu.vector_store %arg6[%c0_20, %c0_21], %52 {strides = array<i32>} : memref<2x128xf32, #tpu.memory_space<vmem>>, vector<2x128xf32>,
    return
  }
  func.func @transform_0(%arg0: i32) -> (i32, i32) {
    %c0_i32 = arith.constant 0 : i32
    %c0_i32_0 = arith.constant 0 : i32
    return %c0_i32, %arg0 : i32, i32
  }
  func.func @transform_1(%arg0: i32) -> (i32, i32) {
    %c0_i32 = arith.constant 0 : i32
    %c0_i32_0 = arith.constant 0 : i32
    %c0_i32_1 = arith.constant 0 : i32
    return %c0_i32, %c0_i32_0 : i32, i32
  }
  func.func @transform_2(%arg0: i32) -> (i32, i32) {
    %c0_i32 = arith.constant 0 : i32
    %c0_i32_0 = arith.constant 0 : i32
    %c0_i32_1 = arith.constant 0 : i32
    return %c0_i32, %c0_i32_0 : i32, i32
  }
  func.func @transform_3(%arg0: i32) -> (i32, i32) {
    %c0_i32 = arith.constant 0 : i32
    %c0_i32_0 = arith.constant 0 : i32
    %c0_i32_1 = arith.constant 0 : i32
    return %c0_i32, %c0_i32_0 : i32, i32
  }
  func.func @transform_4(%arg0: i32) -> (i32, i32) {
    %c0_i32 = arith.constant 0 : i32
    %c0_i32_0 = arith.constant 0 : i32
    %c0_i32_1 = arith.constant 0 : i32
    return %c0_i32, %c0_i32_0 : i32, i32
  }
  func.func @transform_5(%arg0: i32) -> (i32, i32) {
    %c0_i32 = arith.constant 0 : i32
    %c0_i32_0 = arith.constant 0 : i32
    return %c0_i32, %arg0 : i32, i32
  }
}

</mosaic_0001>

<llo_original>
// kernel: tpu_custom_call.1
$region0: #{tpu_custom_call.1}
  #allocation0 [shape = 'u32[]', space=smem, size = 0x4, offset = 0x4, fixed_abs, tag = 'smem constant byte address 0x4 - core index']
  #allocation1 [shape = 'u32[144,128]{1,0:T(1,128)}', space=vmem, size = 0x12000, scoped, tag = 'internal scratch']
  %s0 = inlined_call_operand.vmem [shape: f32[4,128], index: 0, kind: input, shape index: {}]
  %s1 = inlined_call_operand.vmem [shape: f32[128,4], index: 1, kind: input, shape index: {}]
  %s2 = inlined_call_operand.vmem [shape: f32[128,1], index: 2, kind: input, shape index: {}]
  %s3 = inlined_call_operand.vmem [shape: f32[128,2], index: 3, kind: input, shape index: {}]
  %s4 = inlined_call_operand.vmem [shape: f32[1,2], index: 4, kind: input, shape index: {}]
  %s5 = inlined_call_operand.hbm [shape: f32[2,128], index: 5, kind: output, shape index: {}]
  %s6 = sld [smem:[#allocation0]]
  $region30: #{tpu_custom_call.1} parent=0
    _
  %s8 = ssub.s32 1, %s6
  %s9 = scalar_select 0, %s8, %s6
  $region1: #{tpu_custom_call.1} parent=0
    #allocation2 [shape = 'u8[1024]{0}', space=vmem, size = 0x400, scoped, tag = 'output window, operand 0, single buffered']
    #allocation3 [shape = 's32[1]{0}', space=sflag, size = 0x4, scoped, tag = 'scoped memory for tpu_custom_call.1']
    %10 = vsyncpa [#allocation3], 0
    // Predicated region
    $region2: #{tpu_custom_call.1} parent=1 // pred_check
      _
    $region3: #{tpu_custom_call.1} parent=1 // pred_check_branch
      %12 = sbr.rel (0) target = $region5
    $region4: #{tpu_custom_call.1} parent=1 // pred_region
      _
    $region5: #{tpu_custom_call.1} parent=1 // pred_fallthru
      _
    // Predicated region
    $region6: #{tpu_custom_call.1} parent=1 // pred_check
      _
    $region7: #{tpu_custom_call.1} parent=1 // pred_check_branch
      %14 = sbr.rel (0) target = $region9
    $region8: #{tpu_custom_call.1} parent=1 // pred_region
      _
    $region9: #{tpu_custom_call.1} parent=1 // pred_fallthru
      _
    // Predicated region
    $region10: #{tpu_custom_call.1} parent=1 // pred_check
      _
    $region11: #{tpu_custom_call.1} parent=1 // pred_check_branch
      %16 = sbr.rel (0) target = $region13
    $region12: #{tpu_custom_call.1} parent=1 // pred_region
      _
    $region13: #{tpu_custom_call.1} parent=1 // pred_fallthru
      _
    // Predicated region
    $region14: #{tpu_custom_call.1} parent=1 // pred_check
      _
    $region15: #{tpu_custom_call.1} parent=1 // pred_check_branch
      %18 = sbr.rel (0) target = $region17
    $region16: #{tpu_custom_call.1} parent=1 // pred_region
      _
    $region17: #{tpu_custom_call.1} parent=1 // pred_fallthru
      _
    // Predicated region
    $region18: #{tpu_custom_call.1} parent=1 // pred_check
      _
    $region19: #{tpu_custom_call.1} parent=1 // pred_check_branch
      %20 = sbr.rel (0) target = $region21
    $region20: #{tpu_custom_call.1} parent=1 // pred_region
      _
    $region21: #{tpu_custom_call.1} parent=1 // pred_fallthru
      _
    %v21 = vld [vmem:[%s0] sm:$0xf]
    %v22 = vld [vmem:[%s1] sm:$0xff]
    %v23 = vld [vmem:[%s1 + $0x8] sm:$0xff]
    %v24 = vld [vmem:[%s1 + $0x10] sm:$0xff]
    %v25 = vld [vmem:[%s1 + $0x18] sm:$0xff]
    %v26 = vld [vmem:[%s1 + $0x20] sm:$0xff]
    %v27 = vld [vmem:[%s1 + $0x28] sm:$0xff]
    %v28 = vld [vmem:[%s1 + $0x30] sm:$0xff]
    %v29 = vld [vmem:[%s1 + $0x38] sm:$0xff]
    %v30 = vld [vmem:[%s1 + $0x40] sm:$0xff]
    %v31 = vld [vmem:[%s1 + $0x48] sm:$0xff]
    %v32 = vld [vmem:[%s1 + $0x50] sm:$0xff]
    %v33 = vld [vmem:[%s1 + $0x58] sm:$0xff]
    %v34 = vld [vmem:[%s1 + $0x60] sm:$0xff]
    %v35 = vld [vmem:[%s1 + $0x68] sm:$0xff]
    %v36 = vld [vmem:[%s1 + $0x70] sm:$0xff]
    %v37 = vld [vmem:[%s1 + $0x78] sm:$0xff]
    %39 = vset.pattern.permute.xlu0 0
    %40 = vperm.xlu0 %39, %v22
    %v41 = vpop.permute.xlu0 %40
    %44 = vset.pattern.permute.xlu0 0
    %45 = vperm.xlu0 %44, %v23
    %v46 = vpop.permute.xlu0 %45
    %49 = vset.pattern.permute.xlu0 0
    %50 = vperm.xlu0 %49, %v24
    %v51 = vpop.permute.xlu0 %50
    %54 = vset.pattern.permute.xlu0 0
    %55 = vperm.xlu0 %54, %v25
    %v56 = vpop.permute.xlu0 %55
    %59 = vset.pattern.permute.xlu0 0
    %60 = vperm.xlu0 %59, %v26
    %v61 = vpop.permute.xlu0 %60
    %64 = vset.pattern.permute.xlu0 0
    %65 = vperm.xlu0 %64, %v27
    %v66 = vpop.permute.xlu0 %65
    %69 = vset.pattern.permute.xlu0 0
    %70 = vperm.xlu0 %69, %v28
    %v71 = vpop.permute.xlu0 %70
    %74 = vset.pattern.permute.xlu0 0
    %75 = vperm.xlu0 %74, %v29
    %v76 = vpop.permute.xlu0 %75
    %79 = vset.pattern.permute.xlu0 0
    %80 = vperm.xlu0 %79, %v30
    %v81 = vpop.permute.xlu0 %80
    %84 = vset.pattern.permute.xlu0 0
    %85 = vperm.xlu0 %84, %v31
    %v86 = vpop.permute.xlu0 %85
    %89 = vset.pattern.permute.xlu0 0
    %90 = vperm.xlu0 %89, %v32
    %v91 = vpop.permute.xlu0 %90
    %94 = vset.pattern.permute.xlu0 0
    %95 = vperm.xlu0 %94, %v33
    %v96 = vpop.permute.xlu0 %95
    %99 = vset.pattern.permute.xlu0 0
    %100 = vperm.xlu0 %99, %v34
    %v101 = vpop.permute.xlu0 %100
    %104 = vset.pattern.permute.xlu0 0
    %105 = vperm.xlu0 %104, %v35
    %v106 = vpop.permute.xlu0 %105
    %109 = vset.pattern.permute.xlu0 0
    %110 = vperm.xlu0 %109, %v36
    %v111 = vpop.permute.xlu0 %110
    %114 = vset.pattern.permute.xlu0 0
    %115 = vperm.xlu0 %114, %v37
    %v116 = vpop.permute.xlu0 %115
    %v118 = vlaneseq
    %v119 = vshrl.u32 %v118, 7
    %v120 = vsub.s32 0, %v119
    %v121 = vrot.slane %v21, %v120
    %v122 = vmul.f32 %v41, %v121
    %v123 = vmul.f32 %v46, %v121
    %v124 = vmul.f32 %v51, %v121
    %v125 = vmul.f32 %v56, %v121
    %v126 = vmul.f32 %v61, %v121
    %v127 = vmul.f32 %v66, %v121
    %v128 = vmul.f32 %v71, %v121
    %v129 = vmul.f32 %v76, %v121
    %v130 = vmul.f32 %v81, %v121
    %v131 = vmul.f32 %v86, %v121
    %v132 = vmul.f32 %v91, %v121
    %v133 = vmul.f32 %v96, %v121
    %v134 = vmul.f32 %v101, %v121
    %v135 = vmul.f32 %v106, %v121
    %v136 = vmul.f32 %v111, %v121
    %v137 = vmul.f32 %v116, %v121
    %138 = vset.pattern.permute.xlu0 1
    %139 = vperm.xlu0 %138, %v22
    %v140 = vpop.permute.xlu0 %139
    %142 = vset.pattern.permute.xlu0 1
    %143 = vperm.xlu0 %142, %v23
    %v144 = vpop.permute.xlu0 %143
    %146 = vset.pattern.permute.xlu0 1
    %147 = vperm.xlu0 %146, %v24
    %v148 = vpop.permute.xlu0 %147
    %150 = vset.pattern.permute.xlu0 1
    %151 = vperm.xlu0 %150, %v25
    %v152 = vpop.permute.xlu0 %151
    %154 = vset.pattern.permute.xlu0 1
    %155 = vperm.xlu0 %154, %v26
    %v156 = vpop.permute.xlu0 %155
    %158 = vset.pattern.permute.xlu0 1
    %159 = vperm.xlu0 %158, %v27
    %v160 = vpop.permute.xlu0 %159
    %162 = vset.pattern.permute.xlu0 1
    %163 = vperm.xlu0 %162, %v28
    %v164 = vpop.permute.xlu0 %163
    %166 = vset.pattern.permute.xlu0 1
    %167 = vperm.xlu0 %166, %v29
    %v168 = vpop.permute.xlu0 %167
    %170 = vset.pattern.permute.xlu0 1
    %171 = vperm.xlu0 %170, %v30
    %v172 = vpop.permute.xlu0 %171
    %174 = vset.pattern.permute.xlu0 1
    %175 = vperm.xlu0 %174, %v31
    %v176 = vpop.permute.xlu0 %175
    %178 = vset.pattern.permute.xlu0 1
    %179 = vperm.xlu0 %178, %v32
    %v180 = vpop.permute.xlu0 %179
    %182 = vset.pattern.permute.xlu0 1
    %183 = vperm.xlu0 %182, %v33
    %v184 = vpop.permute.xlu0 %183
    %186 = vset.pattern.permute.xlu0 1
    %187 = vperm.xlu0 %186, %v34
    %v188 = vpop.permute.xlu0 %187
    %190 = vset.pattern.permute.xlu0 1
    %191 = vperm.xlu0 %190, %v35
    %v192 = vpop.permute.xlu0 %191
    %194 = vset.pattern.permute.xlu0 1
    %195 = vperm.xlu0 %194, %v36
    %v196 = vpop.permute.xlu0 %195
    %198 = vset.pattern.permute.xlu0 1
    %199 = vperm.xlu0 %198, %v37
    %v200 = vpop.permute.xlu0 %199
    %v202 = vlaneseq
    %v203 = vshrl.u32 %v202, 7
    %v204 = vsub.s32 1, %v203
    %v205 = vrot.slane %v21, %v204
    %v206 = vmul.f32 %v140, %v205
    %v207 = vmul.f32 %v144, %v205
    %v208 = vmul.f32 %v148, %v205
    %v209 = vmul.f32 %v152, %v205
    %v210 = vmul.f32 %v156, %v205
    %v211 = vmul.f32 %v160, %v205
    %v212 = vmul.f32 %v164, %v205
    %v213 = vmul.f32 %v168, %v205
    %v214 = vmul.f32 %v172, %v205
    %v215 = vmul.f32 %v176, %v205
    %v216 = vmul.f32 %v180, %v205
    %v217 = vmul.f32 %v184, %v205
    %v218 = vmul.f32 %v188, %v205
    %v219 = vmul.f32 %v192, %v205
    %v220 = vmul.f32 %v196, %v205
    %v221 = vmul.f32 %v200, %v205
    %v222 = vadd.f32 %v122, %v206
    %v223 = vadd.f32 %v123, %v207
    %v224 = vadd.f32 %v124, %v208
    %v225 = vadd.f32 %v125, %v209
    %v226 = vadd.f32 %v126, %v210
    %v227 = vadd.f32 %v127, %v211
    %v228 = vadd.f32 %v128, %v212
    %v229 = vadd.f32 %v129, %v213
    %v230 = vadd.f32 %v130, %v214
    %v231 = vadd.f32 %v131, %v215
    %v232 = vadd.f32 %v132, %v216
    %v233 = vadd.f32 %v133, %v217
    %v234 = vadd.f32 %v134, %v218
    %v235 = vadd.f32 %v135, %v219
    %v236 = vadd.f32 %v136, %v220
    %v237 = vadd.f32 %v137, %v221
    %238 = vset.pattern.permute.xlu0 2
    %239 = vperm.xlu0 %238, %v22
    %v240 = vpop.permute.xlu0 %239
    %242 = vset.pattern.permute.xlu0 2
    %243 = vperm.xlu0 %242, %v23
    %v244 = vpop.permute.xlu0 %243
    %246 = vset.pattern.permute.xlu0 2
    %247 = vperm.xlu0 %246, %v24
    %v248 = vpop.permute.xlu0 %247
    %250 = vset.pattern.permute.xlu0 2
    %251 = vperm.xlu0 %250, %v25
    %v252 = vpop.permute.xlu0 %251
    %254 = vset.pattern.permute.xlu0 2
    %255 = vperm.xlu0 %254, %v26
    %v256 = vpop.permute.xlu0 %255
    %258 = vset.pattern.permute.xlu0 2
    %259 = vperm.xlu0 %258, %v27
    %v260 = vpop.permute.xlu0 %259
    %262 = vset.pattern.permute.xlu0 2
    %263 = vperm.xlu0 %262, %v28
    %v264 = vpop.permute.xlu0 %263
    %266 = vset.pattern.permute.xlu0 2
    %267 = vperm.xlu0 %266, %v29
    %v268 = vpop.permute.xlu0 %267
    %270 = vset.pattern.permute.xlu0 2
    %271 = vperm.xlu0 %270, %v30
    %v272 = vpop.permute.xlu0 %271
    %274 = vset.pattern.permute.xlu0 2
    %275 = vperm.xlu0 %274, %v31
    %v276 = vpop.permute.xlu0 %275
    %278 = vset.pattern.permute.xlu0 2
    %279 = vperm.xlu0 %278, %v32
    %v280 = vpop.permute.xlu0 %279
    %282 = vset.pattern.permute.xlu0 2
    %283 = vperm.xlu0 %282, %v33
    %v284 = vpop.permute.xlu0 %283
    %286 = vset.pattern.permute.xlu0 2
    %287 = vperm.xlu0 %286, %v34
    %v288 = vpop.permute.xlu0 %287
    %290 = vset.pattern.permute.xlu0 2
    %291 = vperm.xlu0 %290, %v35
    %v292 = vpop.permute.xlu0 %291
    %294 = vset.pattern.permute.xlu0 2
    %295 = vperm.xlu0 %294, %v36
    %v296 = vpop.permute.xlu0 %295
    %298 = vset.pattern.permute.xlu0 2
    %299 = vperm.xlu0 %298, %v37
    %v300 = vpop.permute.xlu0 %299
    %v302 = vlaneseq
    %v303 = vshrl.u32 %v302, 7
    %v304 = vsub.s32 2, %v303
    %v305 = vrot.slane %v21, %v304
    %v306 = vmul.f32 %v240, %v305
    %v307 = vmul.f32 %v244, %v305
    %v308 = vmul.f32 %v248, %v305
    %v309 = vmul.f32 %v252, %v305
    %v310 = vmul.f32 %v256, %v305
    %v311 = vmul.f32 %v260, %v305
    %v312 = vmul.f32 %v264, %v305
    %v313 = vmul.f32 %v268, %v305
    %v314 = vmul.f32 %v272, %v305
    %v315 = vmul.f32 %v276, %v305
    %v316 = vmul.f32 %v280, %v305
    %v317 = vmul.f32 %v284, %v305
    %v318 = vmul.f32 %v288, %v305
    %v319 = vmul.f32 %v292, %v305
    %v320 = vmul.f32 %v296, %v305
    %v321 = vmul.f32 %v300, %v305
    %v322 = vadd.f32 %v222, %v306
    %v323 = vadd.f32 %v223, %v307
    %v324 = vadd.f32 %v224, %v308
    %v325 = vadd.f32 %v225, %v309
    %v326 = vadd.f32 %v226, %v310
    %v327 = vadd.f32 %v227, %v311
    %v328 = vadd.f32 %v228, %v312
    %v329 = vadd.f32 %v229, %v313
    %v330 = vadd.f32 %v230, %v314
    %v331 = vadd.f32 %v231, %v315
    %v332 = vadd.f32 %v232, %v316
    %v333 = vadd.f32 %v233, %v317
    %v334 = vadd.f32 %v234, %v318
    %v335 = vadd.f32 %v235, %v319
    %v336 = vadd.f32 %v236, %v320
    %v337 = vadd.f32 %v237, %v321
    %338 = vset.pattern.permute.xlu0 3
    %339 = vperm.xlu0 %338, %v22
    %v340 = vpop.permute.xlu0 %339
    %342 = vset.pattern.permute.xlu0 3
    %343 = vperm.xlu0 %342, %v23
    %v344 = vpop.permute.xlu0 %343
    %346 = vset.pattern.permute.xlu0 3
    %347 = vperm.xlu0 %346, %v24
    %v348 = vpop.permute.xlu0 %347
    %350 = vset.pattern.permute.xlu0 3
    %351 = vperm.xlu0 %350, %v25
    %v352 = vpop.permute.xlu0 %351
    %354 = vset.pattern.permute.xlu0 3
    %355 = vperm.xlu0 %354, %v26
    %v356 = vpop.permute.xlu0 %355
    %358 = vset.pattern.permute.xlu0 3
    %359 = vperm.xlu0 %358, %v27
    %v360 = vpop.permute.xlu0 %359
    %362 = vset.pattern.permute.xlu0 3
    %363 = vperm.xlu0 %362, %v28
    %v364 = vpop.permute.xlu0 %363
    %366 = vset.pattern.permute.xlu0 3
    %367 = vperm.xlu0 %366, %v29
    %v368 = vpop.permute.xlu0 %367
    %370 = vset.pattern.permute.xlu0 3
    %371 = vperm.xlu0 %370, %v30
    %v372 = vpop.permute.xlu0 %371
    %374 = vset.pattern.permute.xlu0 3
    %375 = vperm.xlu0 %374, %v31
    %v376 = vpop.permute.xlu0 %375
    %378 = vset.pattern.permute.xlu0 3
    %379 = vperm.xlu0 %378, %v32
    %v380 = vpop.permute.xlu0 %379
    %382 = vset.pattern.permute.xlu0 3
    %383 = vperm.xlu0 %382, %v33
    %v384 = vpop.permute.xlu0 %383
    %386 = vset.pattern.permute.xlu0 3
    %387 = vperm.xlu0 %386, %v34
    %v388 = vpop.permute.xlu0 %387
    %390 = vset.pattern.permute.xlu0 3
    %391 = vperm.xlu0 %390, %v35
    %v392 = vpop.permute.xlu0 %391
    %394 = vset.pattern.permute.xlu0 3
    %395 = vperm.xlu0 %394, %v36
    %v396 = vpop.permute.xlu0 %395
    %398 = vset.pattern.permute.xlu0 3
    %399 = vperm.xlu0 %398, %v37
    %v400 = vpop.permute.xlu0 %399
    %v402 = vlaneseq
    %v403 = vshrl.u32 %v402, 7
    %v404 = vsub.s32 3, %v403
    %v405 = vrot.slane %v21, %v404
    %v406 = vmul.f32 %v340, %v405
    %v407 = vmul.f32 %v344, %v405
    %v408 = vmul.f32 %v348, %v405
    %v409 = vmul.f32 %v352, %v405
    %v410 = vmul.f32 %v356, %v405
    %v411 = vmul.f32 %v360, %v405
    %v412 = vmul.f32 %v364, %v405
    %v413 = vmul.f32 %v368, %v405
    %v414 = vmul.f32 %v372, %v405
    %v415 = vmul.f32 %v376, %v405
    %v416 = vmul.f32 %v380, %v405
    %v417 = vmul.f32 %v384, %v405
    %v418 = vmul.f32 %v388, %v405
    %v419 = vmul.f32 %v392, %v405
    %v420 = vmul.f32 %v396, %v405
    %v421 = vmul.f32 %v400, %v405
    %v422 = vadd.f32 %v322, %v406
    %v423 = vadd.f32 %v323, %v407
    %v424 = vadd.f32 %v324, %v408
    %v425 = vadd.f32 %v325, %v409
    %v426 = vadd.f32 %v326, %v410
    %v427 = vadd.f32 %v327, %v411
    %v428 = vadd.f32 %v328, %v412
    %v429 = vadd.f32 %v329, %v413
    %v430 = vadd.f32 %v330, %v414
    %v431 = vadd.f32 %v331, %v415
    %v432 = vadd.f32 %v332, %v416
    %v433 = vadd.f32 %v333, %v417
    %v434 = vadd.f32 %v334, %v418
    %v435 = vadd.f32 %v335, %v419
    %v436 = vadd.f32 %v336, %v420
    %v437 = vadd.f32 %v337, %v421
    %v438 = vld [vmem:[%s2] sm:$0xff]
    %v439 = vld [vmem:[%s2 + $0x8] sm:$0xff]
    %v440 = vld [vmem:[%s2 + $0x10] sm:$0xff]
    %v441 = vld [vmem:[%s2 + $0x18] sm:$0xff]
    %v442 = vld [vmem:[%s2 + $0x20] sm:$0xff]
    %v443 = vld [vmem:[%s2 + $0x28] sm:$0xff]
    %v444 = vld [vmem:[%s2 + $0x30] sm:$0xff]
    %v445 = vld [vmem:[%s2 + $0x38] sm:$0xff]
    %v446 = vld [vmem:[%s2 + $0x40] sm:$0xff]
    %v447 = vld [vmem:[%s2 + $0x48] sm:$0xff]
    %v448 = vld [vmem:[%s2 + $0x50] sm:$0xff]
    %v449 = vld [vmem:[%s2 + $0x58] sm:$0xff]
    %v450 = vld [vmem:[%s2 + $0x60] sm:$0xff]
    %v451 = vld [vmem:[%s2 + $0x68] sm:$0xff]
    %v452 = vld [vmem:[%s2 + $0x70] sm:$0xff]
    %v453 = vld [vmem:[%s2 + $0x78] sm:$0xff]
    %455 = vset.pattern.permute.xlu0 0
    %456 = vperm.xlu0 %455, %v438
    %v457 = vpop.permute.xlu0 %456
    %460 = vset.pattern.permute.xlu0 0
    %461 = vperm.xlu0 %460, %v439
    %v462 = vpop.permute.xlu0 %461
    %465 = vset.pattern.permute.xlu0 0
    %466 = vperm.xlu0 %465, %v440
    %v467 = vpop.permute.xlu0 %466
    %470 = vset.pattern.permute.xlu0 0
    %471 = vperm.xlu0 %470, %v441
    %v472 = vpop.permute.xlu0 %471
    %475 = vset.pattern.permute.xlu0 0
    %476 = vperm.xlu0 %475, %v442
    %v477 = vpop.permute.xlu0 %476
    %480 = vset.pattern.permute.xlu0 0
    %481 = vperm.xlu0 %480, %v443
    %v482 = vpop.permute.xlu0 %481
    %485 = vset.pattern.permute.xlu0 0
    %486 = vperm.xlu0 %485, %v444
    %v487 = vpop.permute.xlu0 %486
    %490 = vset.pattern.permute.xlu0 0
    %491 = vperm.xlu0 %490, %v445
    %v492 = vpop.permute.xlu0 %491
    %495 = vset.pattern.permute.xlu0 0
    %496 = vperm.xlu0 %495, %v446
    %v497 = vpop.permute.xlu0 %496
    %500 = vset.pattern.permute.xlu0 0
    %501 = vperm.xlu0 %500, %v447
    %v502 = vpop.permute.xlu0 %501
    %505 = vset.pattern.permute.xlu0 0
    %506 = vperm.xlu0 %505, %v448
    %v507 = vpop.permute.xlu0 %506
    %510 = vset.pattern.permute.xlu0 0
    %511 = vperm.xlu0 %510, %v449
    %v512 = vpop.permute.xlu0 %511
    %515 = vset.pattern.permute.xlu0 0
    %516 = vperm.xlu0 %515, %v450
    %v517 = vpop.permute.xlu0 %516
    %520 = vset.pattern.permute.xlu0 0
    %521 = vperm.xlu0 %520, %v451
    %v522 = vpop.permute.xlu0 %521
    %525 = vset.pattern.permute.xlu0 0
    %526 = vperm.xlu0 %525, %v452
    %v527 = vpop.permute.xlu0 %526
    %530 = vset.pattern.permute.xlu0 0
    %531 = vperm.xlu0 %530, %v453
    %v532 = vpop.permute.xlu0 %531
    %v534 = vadd.f32 %v422, %v457
    %v535 = vadd.f32 %v423, %v462
    %v536 = vadd.f32 %v424, %v467
    %v537 = vadd.f32 %v425, %v472
    %v538 = vadd.f32 %v426, %v477
    %v539 = vadd.f32 %v427, %v482
    %v540 = vadd.f32 %v428, %v487
    %v541 = vadd.f32 %v429, %v492
    %v542 = vadd.f32 %v430, %v497
    %v543 = vadd.f32 %v431, %v502
    %v544 = vadd.f32 %v432, %v507
    %v545 = vadd.f32 %v433, %v512
    %v546 = vadd.f32 %v434, %v517
    %v547 = vadd.f32 %v435, %v522
    %v548 = vadd.f32 %v436, %v527
    %v549 = vadd.f32 %v437, %v532
    %v550 = vmax.f32 %v534, 0.0
    %v551 = vmax.f32 %v535, 0.0
    %v552 = vmax.f32 %v536, 0.0
    %v553 = vmax.f32 %v537, 0.0
    %v554 = vmax.f32 %v538, 0.0
    %v555 = vmax.f32 %v539, 0.0
    %v556 = vmax.f32 %v540, 0.0
    %v557 = vmax.f32 %v541, 0.0
    %v558 = vmax.f32 %v542, 0.0
    %v559 = vmax.f32 %v543, 0.0
    %v560 = vmax.f32 %v544, 0.0
    %v561 = vmax.f32 %v545, 0.0
    %v562 = vmax.f32 %v546, 0.0
    %v563 = vmax.f32 %v547, 0.0
    %v564 = vmax.f32 %v548, 0.0
    %v565 = vmax.f32 %v549, 0.0
    %v566 = vld [vmem:[%s3] sm:$0xff]
    %v567 = vld [vmem:[%s3 + $0x8] sm:$0xff]
    %v568 = vld [vmem:[%s3 + $0x10] sm:$0xff]
    %v569 = vld [vmem:[%s3 + $0x18] sm:$0xff]
    %v570 = vld [vmem:[%s3 + $0x20] sm:$0xff]
    %v571 = vld [vmem:[%s3 + $0x28] sm:$0xff]
    %v572 = vld [vmem:[%s3 + $0x30] sm:$0xff]
    %v573 = vld [vmem:[%s3 + $0x38] sm:$0xff]
    %v574 = vld [vmem:[%s3 + $0x40] sm:$0xff]
    %v575 = vld [vmem:[%s3 + $0x48] sm:$0xff]
    %v576 = vld [vmem:[%s3 + $0x50] sm:$0xff]
    %v577 = vld [vmem:[%s3 + $0x58] sm:$0xff]
    %v578 = vld [vmem:[%s3 + $0x60] sm:$0xff]
    %v579 = vld [vmem:[%s3 + $0x68] sm:$0xff]
    %v580 = vld [vmem:[%s3 + $0x70] sm:$0xff]
    %v581 = vld [vmem:[%s3 + $0x78] sm:$0xff]
    %583 = vset.pattern.permute.xlu0 0
    %584 = vperm.xlu0 %583, %v566
    %v585 = vpop.permute.xlu0 %584
    %588 = vset.pattern.permute.xlu0 0
    %589 = vperm.xlu0 %588, %v567
    %v590 = vpop.permute.xlu0 %589
    %593 = vset.pattern.permute.xlu0 0
    %594 = vperm.xlu0 %593, %v568
    %v595 = vpop.permute.xlu0 %594
    %598 = vset.pattern.permute.xlu0 0
    %599 = vperm.xlu0 %598, %v569
    %v600 = vpop.permute.xlu0 %599
    %603 = vset.pattern.permute.xlu0 0
    %604 = vperm.xlu0 %603, %v570
    %v605 = vpop.permute.xlu0 %604
    %608 = vset.pattern.permute.xlu0 0
    %609 = vperm.xlu0 %608, %v571
    %v610 = vpop.permute.xlu0 %609
    %613 = vset.pattern.permute.xlu0 0
    %614 = vperm.xlu0 %613, %v572
    %v615 = vpop.permute.xlu0 %614
    %618 = vset.pattern.permute.xlu0 0
    %619 = vperm.xlu0 %618, %v573
    %v620 = vpop.permute.xlu0 %619
    %623 = vset.pattern.permute.xlu0 0
    %624 = vperm.xlu0 %623, %v574
    %v625 = vpop.permute.xlu0 %624
    %628 = vset.pattern.permute.xlu0 0
    %629 = vperm.xlu0 %628, %v575
    %v630 = vpop.permute.xlu0 %629
    %633 = vset.pattern.permute.xlu0 0
    %634 = vperm.xlu0 %633, %v576
    %v635 = vpop.permute.xlu0 %634
    %638 = vset.pattern.permute.xlu0 0
    %639 = vperm.xlu0 %638, %v577
    %v640 = vpop.permute.xlu0 %639
    %643 = vset.pattern.permute.xlu0 0
    %644 = vperm.xlu0 %643, %v578
    %v645 = vpop.permute.xlu0 %644
    %648 = vset.pattern.permute.xlu0 0
    %649 = vperm.xlu0 %648, %v579
    %v650 = vpop.permute.xlu0 %649
    %653 = vset.pattern.permute.xlu0 0
    %654 = vperm.xlu0 %653, %v580
    %v655 = vpop.permute.xlu0 %654
    %658 = vset.pattern.permute.xlu0 0
    %659 = vperm.xlu0 %658, %v581
    %v660 = vpop.permute.xlu0 %659
    %v662 = vmul.f32 %v550, %v585
    %v663 = vmul.f32 %v551, %v590
    %v664 = vmul.f32 %v552, %v595
    %v665 = vmul.f32 %v553, %v600
    %v666 = vmul.f32 %v554, %v605
    %v667 = vmul.f32 %v555, %v610
    %v668 = vmul.f32 %v556, %v615
    %v669 = vmul.f32 %v557, %v620
    %v670 = vmul.f32 %v558, %v625
    %v671 = vmul.f32 %v559, %v630
    %v672 = vmul.f32 %v560, %v635
    %v673 = vmul.f32 %v561, %v640
    %v674 = vmul.f32 %v562, %v645
    %v675 = vmul.f32 %v563, %v650
    %v676 = vmul.f32 %v564, %v655
    %v677 = vmul.f32 %v565, %v660
    %v678 = vadd.f32 %v662, %v663
    %v679 = vadd.f32 %v678, %v664
    %v680 = vadd.f32 %v679, %v665
    %v681 = vadd.f32 %v680, %v666
    %v682 = vadd.f32 %v681, %v667
    %v683 = vadd.f32 %v682, %v668
    %v684 = vadd.f32 %v683, %v669
    %v685 = vadd.f32 %v684, %v670
    %v686 = vadd.f32 %v685, %v671
    %v687 = vadd.f32 %v686, %v672
    %v688 = vadd.f32 %v687, %v673
    %v689 = vadd.f32 %v688, %v674
    %v690 = vadd.f32 %v689, %v675
    %v691 = vadd.f32 %v690, %v676
    %v692 = vadd.f32 %v691, %v677
    %v693 = vrot.slane %v692, 4
    %v694 = vadd.f32 %v692, %v693
    %v695 = vrot.slane %v694, 2
    %v696 = vadd.f32 %v694, %v695
    %v697 = vrot.slane %v696, 1
    %v698 = vadd.f32 %v696, %v697
    %v699 = vld [vmem:[%s4] sm:$0x1]
    %701 = vset.pattern.permute.xlu0 0
    %702 = vperm.xlu0 %701, %v699
    %v703 = vpop.permute.xlu0 %702
    %v705 = vlaneseq
    %v706 = vshrl.u32 %v705, 7
    %v707 = vsub.s32 0, %v706
    %v708 = vrot.slane %v703, %v707
    %v709 = vadd.f32 %v698, %v708
    %710 = vset.pattern.permute.xlu0 1
    %711 = vperm.xlu0 %710, %v566
    %v712 = vpop.permute.xlu0 %711
    %714 = vset.pattern.permute.xlu0 1
    %715 = vperm.xlu0 %714, %v567
    %v716 = vpop.permute.xlu0 %715
    %718 = vset.pattern.permute.xlu0 1
    %719 = vperm.xlu0 %718, %v568
    %v720 = vpop.permute.xlu0 %719
    %722 = vset.pattern.permute.xlu0 1
    %723 = vperm.xlu0 %722, %v569
    %v724 = vpop.permute.xlu0 %723
    %726 = vset.pattern.permute.xlu0 1
    %727 = vperm.xlu0 %726, %v570
    %v728 = vpop.permute.xlu0 %727
    %730 = vset.pattern.permute.xlu0 1
    %731 = vperm.xlu0 %730, %v571
    %v732 = vpop.permute.xlu0 %731
    %734 = vset.pattern.permute.xlu0 1
    %735 = vperm.xlu0 %734, %v572
    %v736 = vpop.permute.xlu0 %735
    %738 = vset.pattern.permute.xlu0 1
    %739 = vperm.xlu0 %738, %v573
    %v740 = vpop.permute.xlu0 %739
    %742 = vset.pattern.permute.xlu0 1
    %743 = vperm.xlu0 %742, %v574
    %v744 = vpop.permute.xlu0 %743
    %746 = vset.pattern.permute.xlu0 1
    %747 = vperm.xlu0 %746, %v575
    %v748 = vpop.permute.xlu0 %747
    %750 = vset.pattern.permute.xlu0 1
    %751 = vperm.xlu0 %750, %v576
    %v752 = vpop.permute.xlu0 %751
    %754 = vset.pattern.permute.xlu0 1
    %755 = vperm.xlu0 %754, %v577
    %v756 = vpop.permute.xlu0 %755
    %758 = vset.pattern.permute.xlu0 1
    %759 = vperm.xlu0 %758, %v578
    %v760 = vpop.permute.xlu0 %759
    %762 = vset.pattern.permute.xlu0 1
    %763 = vperm.xlu0 %762, %v579
    %v764 = vpop.permute.xlu0 %763
    %766 = vset.pattern.permute.xlu0 1
    %767 = vperm.xlu0 %766, %v580
    %v768 = vpop.permute.xlu0 %767
    %770 = vset.pattern.permute.xlu0 1
    %771 = vperm.xlu0 %770, %v581
    %v772 = vpop.permute.xlu0 %771
    %v774 = vmul.f32 %v550, %v712
    %v775 = vmul.f32 %v551, %v716
    %v776 = vmul.f32 %v552, %v720
    %v777 = vmul.f32 %v553, %v724
    %v778 = vmul.f32 %v554, %v728
    %v779 = vmul.f32 %v555, %v732
    %v780 = vmul.f32 %v556, %v736
    %v781 = vmul.f32 %v557, %v740
    %v782 = vmul.f32 %v558, %v744
    %v783 = vmul.f32 %v559, %v748
    %v784 = vmul.f32 %v560, %v752
    %v785 = vmul.f32 %v561, %v756
    %v786 = vmul.f32 %v562, %v760
    %v787 = vmul.f32 %v563, %v764
    %v788 = vmul.f32 %v564, %v768
    %v789 = vmul.f32 %v565, %v772
    %v790 = vadd.f32 %v774, %v775
    %v791 = vadd.f32 %v790, %v776
    %v792 = vadd.f32 %v791, %v777
    %v793 = vadd.f32 %v792, %v778
    %v794 = vadd.f32 %v793, %v779
    %v795 = vadd.f32 %v794, %v780
    %v796 = vadd.f32 %v795, %v781
    %v797 = vadd.f32 %v796, %v782
    %v798 = vadd.f32 %v797, %v783
    %v799 = vadd.f32 %v798, %v784
    %v800 = vadd.f32 %v799, %v785
    %v801 = vadd.f32 %v800, %v786
    %v802 = vadd.f32 %v801, %v787
    %v803 = vadd.f32 %v802, %v788
    %v804 = vadd.f32 %v803, %v789
    %v805 = vrot.slane %v804, 4
    %v806 = vadd.f32 %v804, %v805
    %v807 = vrot.slane %v806, 2
    %v808 = vadd.f32 %v806, %v807
    %v809 = vrot.slane %v808, 1
    %v810 = vadd.f32 %v808, %v809
    %811 = vset.pattern.permute.xlu0 1
    %812 = vperm.xlu0 %811, %v699
    %v813 = vpop.permute.xlu0 %812
    %v815 = vlaneseq
    %v816 = vshrl.u32 %v815, 7
    %v817 = vsub.s32 0, %v816
    %v818 = vrot.slane %v813, %v817
    %v819 = vadd.f32 %v810, %v818
    %v820 = vsub.f32 %v819, %v709
    %v821 = vmul.f32 %v820, 1.442695
    %v822 = vpow.pop %v821
    %v823 = vadd.f32 %v822, 1.0
    %v824 = vrcp.pop %v823
    %v825 = vsub.f32 1.0, %v824
    %vm826 = vcmask 1040384
    %v827 = vsel %vm826, %v824, %v825
    %828 = vst [vmem:[#allocation2] sm:$0x3] %v827
    // Predicated region
    $region22: #{tpu_custom_call.1} parent=1 // pred_check
      _
    $region23: #{tpu_custom_call.1} parent=1 // pred_check_branch
      %830 = sbr.rel (0) target = $region25
    $region24: #{tpu_custom_call.1} parent=1 // pred_region
      %s832 = ssub.s32 32, 32
      %833 = vsyncadd [#allocation3], %s832
      %s835 = sshll.u32 [#allocation2], 4
      %s836 = int_to_ptr.vmem [resolvable:$true] %s835
      %838 = dma.vmem_to_hbm [thread:$0]  %s836, 32, %s5, [#allocation3]
    $region25: #{tpu_custom_call.1} parent=1 // pred_fallthru
      _
    // Predicated region
    $region26: #{tpu_custom_call.1} parent=1 // pred_check
      _
    $region27: #{tpu_custom_call.1} parent=1 // pred_check_branch
      %840 = sbr.rel (0) target = $region29
    $region28: #{tpu_custom_call.1} parent=1 // pred_region
      %841 = dma.done [#allocation3], 32
    $region29: #{tpu_custom_call.1} parent=1 // pred_fallthru
      _
    %842 = vsyncpa [#allocation3], 1

</llo_original>
